<compile_context>
chip_gen: v7x
topology: tpu7x:2x2x1
jax: 0.10.0
libtpu: 0.0.40
codegen_flags: <defaults>
</compile_context>

<pallas_src>
import jax
import jax.numpy as jnp
from jax import lax
from jax.experimental import pallas as pl
from jax.experimental.pallas import tpu as pltpu


_MAX_TILE_HW = 8192            # lanes per spatial block when H*W must be split
_TARGET_BLOCK_BYTES = 4 << 20  # ~4 MiB per input block (VMEM-padded accounting)


def _round_up(x, m):
    return ((x + m - 1) // m) * m


def _pick_row_tiling(rows, row_bytes, target_bytes):
    """Choose (tile_rows, rows_padded).

    tile_rows is a multiple of 8, sized so one input block is ~target_bytes of
    VMEM.  Prefer a divisor of `rows` so no padded copy of the input is needed;
    fall back to padding only when rows has no reasonable divisor.
    """
    rows8 = _round_up(rows, 8)
    ideal = max(8, (max(1, target_bytes // row_bytes) // 8) * 8)
    ideal = min(ideal, rows8)
    if rows % ideal == 0:
        return ideal, rows
    if rows % 8 == 0:
        t = ideal
        while t >= 8 and rows % t != 0:
            t -= 8
        if rows % t == 0 and t >= max(8, ideal // 8):
            return t, rows
    return ideal, _round_up(rows, ideal)


def _make_single_block_kernel(hw_total):
    """H*W fits in one block: reduce directly, no accumulators needed."""
    inv_hw = 1.0 / hw_total

    def kernel(x_ref, out_ref):
        x = x_ref[...]                                            # (tile_rows, hw), native dtype
        mx = jnp.max(x, axis=1, keepdims=True)                    # exact in native dtype
        sm = jnp.sum(x.astype(jnp.float32), axis=1, keepdims=True)
        out_ref[:, 0:1] = mx.astype(out_ref.dtype)
        out_ref[:, 1:2] = (sm * inv_hw).astype(out_ref.dtype)

    return kernel


def _make_multi_block_kernel(hw_total, tile_hw, mask_cols):
    """H*W is blocked along a trailing 'arbitrary' grid axis with running
    max/sum accumulators in f32 VMEM scratch."""
    inv_hw = 1.0 / hw_total

    def kernel(x_ref, out_ref, max_acc, sum_acc):
        j = pl.program_id(1)

        @pl.when(j == 0)
        def _init():
            max_acc[...] = jnp.full(max_acc.shape, -jnp.inf, dtype=max_acc.dtype)
            sum_acc[...] = jnp.zeros(sum_acc.shape, dtype=sum_acc.dtype)

        x = x_ref[...]                                            # (tile_rows, tile_hw)
        if mask_cols:
            col = lax.broadcasted_iota(jnp.int32, x.shape, 1) + j * tile_hw
            x_for_max = jnp.where(col < hw_total, x,
                                  jnp.array(-jnp.inf, dtype=x.dtype))
        else:
            x_for_max = x
        blk_max = jnp.max(x_for_max, axis=1, keepdims=True)       # native dtype, exact
        blk_sum = jnp.sum(x.astype(jnp.float32), axis=1, keepdims=True)  # pad cols are 0
        max_acc[...] = jnp.maximum(max_acc[...], blk_max.astype(jnp.float32))
        sum_acc[...] = sum_acc[...] + blk_sum

        @pl.when(j == pl.num_programs(1) - 1)
        def _finalize():
            out_ref[:, 0:1] = max_acc[...].astype(out_ref.dtype)
            out_ref[:, 1:2] = (sum_acc[...] * inv_hw).astype(out_ref.dtype)

    return kernel


def adaptive_concat_pool2d(x, target_block_bytes=_TARGET_BLOCK_BYTES):
    """Equivalent of AdaptiveConcatPool2d() forward: cat([maxpool(x), avgpool(x)], 1).

    x: (N, C, H, W)  ->  (N, 2*C, 1, 1)   (max channels first, then avg).
    """
    assert jnp.issubdtype(x.dtype, jnp.floating), "float feature maps expected"
    N, C, H, W = x.shape
    rows, hw = N * C, H * W
    itemsize = jnp.dtype(x.dtype).itemsize
    x2d = x.reshape(rows, hw)

    # ---- tile the spatial (reduction) axis -------------------------------
    if hw <= _MAX_TILE_HW:
        tile_hw, hw_padded = hw, hw            # full-extent block, no padding
    else:
        tile_hw = None
        if hw % 128 == 0:
            # Prefer a multiple-of-128 divisor of hw -> no column padding copy.
            for t in range(_MAX_TILE_HW, 1024 - 1, -128):
                if hw % t == 0:
                    tile_hw = t
                    break
        if tile_hw is not None:
            hw_padded = hw
        else:
            tile_hw = _MAX_TILE_HW
            hw_padded = _round_up(hw, tile_hw)
    mask_cols = hw_padded != hw
    n_hw_tiles = hw_padded // tile_hw

    # ---- tile the rows axis (size includes VMEM lane padding) ------------
    row_bytes = _round_up(tile_hw, 128) * itemsize
    tile_rows, rows_padded = _pick_row_tiling(rows, row_bytes, target_block_bytes)
    n_row_tiles = rows_padded // tile_rows

    if rows_padded != rows or hw_padded != hw:
        x2d = jnp.pad(x2d, ((0, rows_padded - rows), (0, hw_padded - hw)))

    out_shape = jax.ShapeDtypeStruct((rows_padded, 2), x.dtype)
    compiler_params_1d = pltpu.CompilerParams(
        dimension_semantics=("parallel",),
        vmem_limit_bytes=32 * 1024 * 1024,
    )
    compiler_params_2d = pltpu.CompilerParams(
        dimension_semantics=("parallel", "arbitrary"),
        vmem_limit_bytes=32 * 1024 * 1024,
    )

    if n_hw_tiles == 1:
        out2 = pl.pallas_call(
            _make_single_block_kernel(hw),
            out_shape=out_shape,
            grid_spec=pltpu.PrefetchScalarGridSpec(
                num_scalar_prefetch=0,
                grid=(n_row_tiles,),
                in_specs=[pl.BlockSpec((tile_rows, tile_hw), lambda i: (i, 0))],
                out_specs=pl.BlockSpec((tile_rows, 2), lambda i: (i, 0)),
            ),
            compiler_params=compiler_params_1d,
        )(x2d)
    else:
        out2 = pl.pallas_call(
            _make_multi_block_kernel(hw, tile_hw, mask_cols),
            out_shape=out_shape,
            grid_spec=pltpu.PrefetchScalarGridSpec(
                num_scalar_prefetch=0,
                grid=(n_row_tiles, n_hw_tiles),
                in_specs=[pl.BlockSpec((tile_rows, tile_hw), lambda i, j: (i, j))],
                out_specs=pl.BlockSpec((tile_rows, 2), lambda i, j: (i, 0)),
                scratch_shapes=[
                    pltpu.VMEM((tile_rows, 1), jnp.float32),   # running max
                    pltpu.VMEM((tile_rows, 1), jnp.float32),   # running sum
                ],
            ),
            compiler_params=compiler_params_2d,
        )(x2d)

    # (rows, 2) -> (N, 2*C, 1, 1) with max channels first, then avg (tiny glue).
    out2 = out2[:rows].reshape(N, C, 2)
    return out2.transpose(0, 2, 1).reshape(N, 2 * C, 1, 1)


if __name__ == "__main__":
    keys = jax.random.split(jax.random.PRNGKey(0), 4)

    def _ref(x):
        return jnp.concatenate(
            [jnp.max(x, axis=(2, 3), keepdims=True),
             jnp.mean(x, axis=(2, 3), keepdims=True)], axis=1)

    # Primary small case (single spatial block, exact row tiling).
    x1 = jax.random.normal(keys[0], (2, 4, 16, 16), dtype=jnp.float32)
    out1 = jax.block_until_ready(adaptive_concat_pool2d(x1))
    assert out1.shape == (2, 8, 1, 1), out1.shape
    assert jnp.allclose(out1, _ref(x1), atol=1e-5, rtol=1e-5)

    # Ragged row count + hw not a multiple of 128 (typical 7x7 head).
    x2 = jax.random.normal(keys[1], (2, 3, 7, 7), dtype=jnp.float32)
    out2 = jax.block_until_ready(adaptive_concat_pool2d(x2))
    assert out2.shape == (2, 6, 1, 1), out2.shape
    assert jnp.allclose(out2, _ref(x2), atol=1e-5, rtol=1e-5)

    # Large spatial size -> blocked hw axis with running accumulators.
    x3 = jax.random.normal(keys[2], (2, 4, 96, 96), dtype=jnp.float32)
    out3 = jax.block_until_ready(adaptive_concat_pool2d(x3))
    assert jnp.allclose(out3, _ref(x3), atol=1e-5, rtol=1e-5)

    # Large spatial size that needs column padding + masked max.
    x4 = jax.random.normal(keys[3], (2, 4, 91, 91), dtype=jnp.float32)
    out4 = jax.block_until_ready(adaptive_concat_pool2d(x4))
    assert jnp.allclose(out4, _ref(x4), atol=1e-5, rtol=1e-5)

    print("KERNEL_OK")
</pallas_src>

<mosaic_0001>
module attributes {stable_mosaic.version = 11 : i64} {
  func.func @kernel(%arg0: i32, %arg1: memref<8x256xf32, #tpu.memory_space<vmem>>, %arg2: memref<8x2xf32, #tpu.memory_space<vmem>>) attributes {dimension_semantics = [#tpu.dimension_semantics<parallel>], iteration_bounds = array<i64: 1>, scalar_prefetch = 0 : i64, scratch_operands = 0 : i64, tpu.core_type = #tpu.core_type<tc>, window_params = [{transform_indices = @transform_0, window_bounds = array<i64: 8, 256>}, {transform_indices = @transform_1, window_bounds = array<i64: 8, 2>}]} {
    %c0 = arith.constant 0 : index
    %c0_0 = arith.constant 0 : index
    %0 = vector.load %arg1[%c0, %c0_0] : memref<8x256xf32, #tpu.memory_space<vmem>>, vector<8x256xf32>
    %cst = arith.constant dense<0xFF800000> : vector<8xf32>
    %1 = vector.multi_reduction <maximumf>, %0, %cst [1] : vector<8x256xf32> to vector<8xf32>
    %2 = vector.shape_cast %1 : vector<8xf32> to vector<8x1xf32>
    %cst_1 = arith.constant dense<0.000000e+00> : vector<8xf32>
    %3 = vector.multi_reduction <add>, %0, %cst_1 [1] : vector<8x256xf32> to vector<8xf32>
    %4 = vector.shape_cast %3 : vector<8xf32> to vector<8x1xf32>
    %c0_2 = arith.constant 0 : index
    %c0_3 = arith.constant 0 : index
    %5 = vector.load %arg2[%c0_2, %c0_3] : memref<8x2xf32, #tpu.memory_space<vmem>>, vector<8x1xf32>
    tpu.vector_store %arg2[%c0_2, %c0_3], %2 {strides = array<i32>} : memref<8x2xf32, #tpu.memory_space<vmem>>, vector<8x1xf32>,
    %cst_4 = arith.constant 3.906250e-03 : f32
    %6 = vector.broadcast %cst_4 : f32 to vector<8x1xf32>
    %7 = arith.mulf %4, %6 : vector<8x1xf32>
    %c0_5 = arith.constant 0 : index
    %c1 = arith.constant 1 : index
    %8 = vector.load %arg2[%c0_5, %c1] : memref<8x2xf32, #tpu.memory_space<vmem>>, vector<8x1xf32>
    tpu.vector_store %arg2[%c0_5, %c1], %7 {strides = array<i32>} : memref<8x2xf32, #tpu.memory_space<vmem>>, vector<8x1xf32>,
    return
  }
  func.func @transform_0(%arg0: i32) -> (i32, i32) {
    %c0_i32 = arith.constant 0 : i32
    %c0_i32_0 = arith.constant 0 : i32
    return %arg0, %c0_i32 : i32, i32
  }
  func.func @transform_1(%arg0: i32) -> (i32, i32) {
    %c0_i32 = arith.constant 0 : i32
    %c0_i32_0 = arith.constant 0 : i32
    return %arg0, %c0_i32 : i32, i32
  }
}

</mosaic_0001>

<llo_original>
// kernel: tpu_custom_call.1
$region0: #{tpu_custom_call.1}
  #allocation0 [shape = 'u32[]', space=smem, size = 0x4, offset = 0x4, fixed_abs, tag = 'smem constant byte address 0x4 - core index']
  #allocation1 [shape = 'u32[144,128]{1,0:T(1,128)}', space=vmem, size = 0x12000, scoped, tag = 'internal scratch']
  %s0 = inlined_call_operand.hbm [shape: f32[8,256], index: 0, kind: input, shape index: {}]
  %s1 = inlined_call_operand.vmem [shape: f32[8,2], index: 1, kind: output, shape index: {}]
  %s2 = sld [smem:[#allocation0]]
  $region18: #{tpu_custom_call.1} parent=0
    _
  %s4 = ssub.s32 1, %s2
  %s5 = scalar_select 0, %s4, %s2
  $region1: #{tpu_custom_call.1} parent=0
    #allocation2 [shape = 'u8[8192]{0}', space=vmem, size = 0x2000, scoped, tag = 'input window, operand 0, single buffered']
    #allocation3 [shape = 's32[1]{0}', space=sflag, size = 0x4, scoped, tag = 'scoped memory for tpu_custom_call.1']
    %6 = vsyncpa [#allocation3], 0
    // Predicated region
    $region2: #{tpu_custom_call.1} parent=1 // pred_check
      _
    $region3: #{tpu_custom_call.1} parent=1 // pred_check_branch
      %8 = sbr.rel (0) target = $region5
    $region4: #{tpu_custom_call.1} parent=1 // pred_region
      %s10 = ssub.s32 256, 256
      %11 = vsyncadd [#allocation3], %s10
      %s13 = sshll.u32 [#allocation2], 4
      %s14 = int_to_ptr.vmem [resolvable:$true] %s13
      %16 = dma.hbm_to_vmem [thread:$0]  %s0, 256, %s14, [#allocation3]
    $region5: #{tpu_custom_call.1} parent=1 // pred_fallthru
      _
    // Predicated region
    $region6: #{tpu_custom_call.1} parent=1 // pred_check
      _
    $region7: #{tpu_custom_call.1} parent=1 // pred_check_branch
      %18 = sbr.rel (0) target = $region9
    $region8: #{tpu_custom_call.1} parent=1 // pred_region
      %19 = dma.done [#allocation3], 256
    $region9: #{tpu_custom_call.1} parent=1 // pred_fallthru
      _
    %v20 = vld [vmem:[#allocation2] sm:$0xff]
    %v21 = vld [vmem:[#allocation2 + $0x8] sm:$0xff]
    %v22 = vmax.f32 %v20, %v21
    %23 = vmax.xlane.f32.xlu0 %v22
    %v24 = vpop.xlane.xlu0 %23
    %v25 = vadd.f32 %v20, %v21
    %26 = vadd.xlane.f32.xlu0 %v25
    %v27 = vpop.xlane.xlu0 %26
    %vm28 = vcmask 7168
    %29 = vst.msk [vmem:[%s1] sm:$0xff] %vm28, %v24
    %v30 = vmul.f32 %v27, 0.00390625
    %vm31 = vcmask 15368
    %32 = vst.msk [vmem:[%s1] sm:$0xff] %vm31, %v30
    // Predicated region
    $region10: #{tpu_custom_call.1} parent=1 // pred_check
      _
    $region11: #{tpu_custom_call.1} parent=1 // pred_check_branch
      %34 = sbr.rel (0) target = $region13
    $region12: #{tpu_custom_call.1} parent=1 // pred_region
      _
    $region13: #{tpu_custom_call.1} parent=1 // pred_fallthru
      _
    // Predicated region
    $region14: #{tpu_custom_call.1} parent=1 // pred_check
      _
    $region15: #{tpu_custom_call.1} parent=1 // pred_check_branch
      %36 = sbr.rel (0) target = $region17
    $region16: #{tpu_custom_call.1} parent=1 // pred_region
      _
    $region17: #{tpu_custom_call.1} parent=1 // pred_fallthru
      _
    %37 = vsyncpa [#allocation3], 1

</llo_original>
